<compile_context>
chip_gen: v5e
topology: v5e:2x2
jax: 0.10.0
libtpu: 0.0.40
codegen_flags: <defaults>
</compile_context>

<pallas_src>
import functools

import jax
import jax.numpy as jnp
from jax.experimental import pallas as pl
from jax.experimental.pallas import tpu as pltpu

BN_EPS = 1e-5
LANE = 128


def _round_up(n, m):
    return ((n + m - 1) // m) * m


# ---------------------------------------------------------------------------
# Kernel
# ---------------------------------------------------------------------------
def _mlp_kernel(x_ref, w1, w2, w3, w4, w5t, bias_ref, o_ref, *, out_pads):
    """Fused 5-layer MLP.

    BatchNorm is pre-folded into (W, b).  Matmuls run bf16 x bf16 -> f32 on
    the MXU; bias / ReLU / sigmoid epilogue in f32.  The final Linear
    (out_features=1) is computed transposed so the batch maps to lanes and the
    output store is lane-dense.
    """
    # In-kernel downcast: input block arrives as f32 straight from HBM.
    h = x_ref[...].astype(jnp.bfloat16)                  # (TB, in_features)

    def hidden_layer(h_bf16, w_ref, li):
        y = jnp.dot(h_bf16, w_ref[...], preferred_element_type=jnp.float32)
        y = y + bias_ref[li:li + 1, :out_pads[li]]       # folded Linear+BN bias
        y = jnp.maximum(y, 0.0)                          # ReLU
        # TODO(synk): training-mode Dropout (pltpu PRNG) intentionally omitted;
        # nn.Dropout is the identity at inference.
        return y.astype(jnp.bfloat16)                    # bf16 for next MXU pass

    h = hidden_layer(h, w1, 0)
    h = hidden_layer(h, w2, 1)
    h = hidden_layer(h, w3, 2)
    h = hidden_layer(h, w4, 3)                           # (TB, 128) bf16

    # Final Linear transposed: (8, K) @ (K, TB) -> (8, TB); row 0 is real.
    yT = jnp.dot(w5t[...], h.T, preferred_element_type=jnp.float32)
    yT = yT + bias_ref[4:5, 0:1]                         # scalar final bias
    o_ref[...] = jax.nn.sigmoid(yT[0:1, :]).astype(o_ref.dtype)   # (1, TB)


# ---------------------------------------------------------------------------
# Parameter packing: fold BN, lane-pad, cast weights to bf16, pack biases
# ---------------------------------------------------------------------------
def pack_params(params):
    """Returns (hidden weights bf16 list, w5t bf16, bias_pack f32, out_pads)."""
    idx = 0
    folded = []
    for li in range(5):
        w, b = params[idx], params[idx + 1]              # w: (in, out), b: (1, out)
        idx += 2
        w = w.astype(jnp.float32)
        b = b.reshape(-1).astype(jnp.float32)
        if li < 4:                                       # Linear followed by BatchNorm1d
            g, be, m, v = params[idx:idx + 4]
            idx += 4
            scale = g.reshape(-1) / jnp.sqrt(v.reshape(-1) + BN_EPS)
            w = w * scale[None, :]
            b = (b - m.reshape(-1)) * scale + be.reshape(-1)
        folded.append((w, b))

    out_pads = tuple(_round_up(w.shape[1], LANE) for w, _ in folded[:4])
    max_pad = max(out_pads)

    weights = []
    bias_rows = []
    prev_out_pad = None
    for li in range(4):                                  # hidden layers
        w, b = folded[li]
        in_dim, out_dim = w.shape
        in_pad = in_dim if li == 0 else prev_out_pad
        w_p = jnp.zeros((in_pad, out_pads[li]), jnp.float32)
        w_p = w_p.at[:in_dim, :out_dim].set(w)
        weights.append(w_p.astype(jnp.bfloat16))
        bias_rows.append(jnp.zeros((max_pad,), jnp.float32).at[:out_dim].set(b))
        prev_out_pad = out_pads[li]

    # Final layer packed TRANSPOSED: (8, K_pad), row 0 = real weight column.
    w5, b5 = folded[4]
    in_dim = w5.shape[0]
    w5t = jnp.zeros((8, prev_out_pad), jnp.float32)
    w5t = w5t.at[0, :in_dim].set(w5[:, 0])
    w5t = w5t.astype(jnp.bfloat16)
    bias_rows.append(jnp.zeros((max_pad,), jnp.float32).at[0].set(b5[0]))

    bias_pack = jnp.stack(bias_rows, axis=0)             # (5, max_pad) f32
    return weights, w5t, bias_pack, out_pads


# ---------------------------------------------------------------------------
# Wrapper
# ---------------------------------------------------------------------------
def mlp_forward(x, packed):
    """x: (B, graph_size, graph_size) float32. Returns (B, 1) float32."""
    weights, w5t, bias_pack, out_pads = packed
    B = x.shape[0]
    x_flat = x.reshape(B, -1)                            # nn.Flatten; stays f32
    in_features = x_flat.shape[1]

    # ---- batch tile selection --------------------------------------------
    # Keep the double-buffered f32 input block <= ~6 MiB (v5e 16 MiB scoped
    # VMEM default; also safe on v7x's 64 MiB part), cap at 1024 rows.
    tb_cap = (6 * 1024 * 1024) // (2 * in_features * 4)
    tb_cap = max(128, min(1024, (tb_cap // 128) * 128))
    if B <= 256:
        TB = min(tb_cap, _round_up(B, 8))                # single tile
    else:
        # >= 2 tiles so the parallel grid axis can shard across v7x's 2 TCs;
        # multiple of 128 keeps the (1, TB) output store lane-dense.
        TB = min(tb_cap, _round_up(pl.cdiv(B, 2), 128))
    grid_b = pl.cdiv(B, TB)                              # partial last block OK
    n_out = grid_b * TB
    out_dtype = jnp.float32

    w_specs = [pl.BlockSpec(w.shape, lambda i: (0, 0)) for w in weights]
    w5t_spec = pl.BlockSpec(w5t.shape, lambda i: (0, 0))
    bias_spec = pl.BlockSpec(bias_pack.shape, lambda i: (0, 0))
    in_specs = ([pl.BlockSpec((TB, in_features), lambda i: (i, 0))]
                + w_specs + [w5t_spec, bias_spec])
    out_specs = pl.BlockSpec((1, TB), lambda i: (0, i))  # batch on lanes

    kernel = functools.partial(_mlp_kernel, out_pads=out_pads)

    out = pl.pallas_call(
        kernel,
        out_shape=jax.ShapeDtypeStruct((1, n_out), out_dtype),
        grid=(grid_b,),
        in_specs=in_specs,
        out_specs=out_specs,
        compiler_params=pltpu.CompilerParams(
            # parallel batch axis -> shards across v7x's 2 TensorCores;
            # harmless on single-TC v5e / v6e.
            dimension_semantics=("parallel",),
        ),
    )(x_flat, *weights, w5t, bias_pack)

    return out[0, :B, None]                              # (B, 1)


# ---------------------------------------------------------------------------
# Init + pure-JAX reference (original, un-folded eval-mode semantics)
# ---------------------------------------------------------------------------
def init_params(key, graph_size, specs):
    dims = [graph_size * graph_size, specs["l1"], specs["l2"], specs["l3"],
            specs["l4"], 1]
    params = []
    keys = jax.random.split(key, len(dims) - 1)
    for li in range(len(dims) - 1):
        fan_in, fan_out = dims[li], dims[li + 1]
        kw, kb = jax.random.split(keys[li])
        bound = 1.0 / jnp.sqrt(fan_in)
        w = jax.random.uniform(kw, (fan_in, fan_out), jnp.float32, -bound, bound)
        b = jax.random.uniform(kb, (1, fan_out), jnp.float32, -bound, bound)
        params.append(w)
        params.append(b)
        if li < 4:  # first 4 linears are followed by BatchNorm1d
            params.extend([jnp.ones((1, fan_out), jnp.float32),
                           jnp.zeros((1, fan_out), jnp.float32),
                           jnp.zeros((1, fan_out), jnp.float32),
                           jnp.ones((1, fan_out), jnp.float32)])
    return params


def reference_forward(x, params):
    B = x.shape[0]
    h = x.reshape(B, -1)
    idx = 0
    for li in range(5):
        w, b = params[idx], params[idx + 1]
        idx += 2
        h = h @ w + b
        if li < 4:
            g, be, m, v = params[idx:idx + 4]
            idx += 4
            h = (h - m) / jnp.sqrt(v + BN_EPS) * g + be
            h = jnp.maximum(h, 0.0)
    return jax.nn.sigmoid(h)


if __name__ == "__main__":
    graph_size = 16
    specs = {"l1": 64, "l2": 32, "l3": 32, "l4": 16, "dropout_prob": 0.2}
    B = 8

    key = jax.random.PRNGKey(0)
    kx, kp = jax.random.split(key)
    x = jax.random.normal(kx, (B, graph_size, graph_size), jnp.float32)
    params = init_params(kp, graph_size, specs)

    packed = pack_params(params)          # fold BN, pad, bf16 weights, pack biases

    out = mlp_forward(x, packed)
    out = jax.block_until_ready(out)

    ref = reference_forward(x, params)
    assert out.shape == (B, 1), out.shape
    err = float(jnp.max(jnp.abs(out - ref)))
    # bf16 matmul operands (f32 accumulation) -> loosened tolerance vs f32 ref.
    assert err < 2e-2, f"max err {err}"
    print("KERNEL_OK")
</pallas_src>

<mosaic_0001>
module attributes {stable_mosaic.version = 11 : i64} {
  func.func @_mlp_kernel(%arg0: i32, %arg1: memref<8x256xf32, #tpu.memory_space<vmem>>, %arg2: memref<256x128xbf16, #tpu.memory_space<vmem>>, %arg3: memref<128x128xbf16, #tpu.memory_space<vmem>>, %arg4: memref<128x128xbf16, #tpu.memory_space<vmem>>, %arg5: memref<128x128xbf16, #tpu.memory_space<vmem>>, %arg6: memref<8x128xbf16, #tpu.memory_space<vmem>>, %arg7: memref<5x128xf32, #tpu.memory_space<vmem>>, %arg8: memref<1x8xf32, #tpu.memory_space<vmem>>) attributes {dimension_semantics = [#tpu.dimension_semantics<parallel>], iteration_bounds = array<i64: 1>, scalar_prefetch = 0 : i64, scratch_operands = 0 : i64, tpu.core_type = #tpu.core_type<tc>, window_params = [{transform_indices = @transform_0, window_bounds = array<i64: 8, 256>}, {pipeline_mode = #tpu.pipeline_mode<synchronous>, transform_indices = @transform_1, window_bounds = array<i64: 256, 128>}, {pipeline_mode = #tpu.pipeline_mode<synchronous>, transform_indices = @transform_2, window_bounds = array<i64: 128, 128>}, {pipeline_mode = #tpu.pipeline_mode<synchronous>, transform_indices = @transform_3, window_bounds = array<i64: 128, 128>}, {pipeline_mode = #tpu.pipeline_mode<synchronous>, transform_indices = @transform_4, window_bounds = array<i64: 128, 128>}, {pipeline_mode = #tpu.pipeline_mode<synchronous>, transform_indices = @transform_5, window_bounds = array<i64: 8, 128>}, {pipeline_mode = #tpu.pipeline_mode<synchronous>, transform_indices = @transform_6, window_bounds = array<i64: 5, 128>}, {transform_indices = @transform_7, window_bounds = array<i64: 1, 8>}]} {
    %c0 = arith.constant 0 : index
    %c0_0 = arith.constant 0 : index
    %0 = vector.load %arg1[%c0, %c0_0] : memref<8x256xf32, #tpu.memory_space<vmem>>, vector<8x256xf32>
    %1 = arith.truncf %0 : vector<8x256xf32> to vector<8x256xbf16>
    %c0_1 = arith.constant 0 : index
    %c0_2 = arith.constant 0 : index
    %2 = vector.load %arg2[%c0_1, %c0_2] : memref<256x128xbf16, #tpu.memory_space<vmem>>, vector<256x128xbf16>
    %cst = arith.constant dense<0.000000e+00> : vector<8x128xf32>
    %3 = tpu.matmul %1, %2, %cst {dimension_numbers = #tpu.dot_dimension_numbers<[1], [0], [0], [1], [0, 0, 1, 1], [], []>} : vector<8x256xbf16>, vector<256x128xbf16>, vector<8x128xf32> -> vector<8x128xf32>
    %c0_3 = arith.constant 0 : index
    %c0_4 = arith.constant 0 : index
    %4 = vector.load %arg7[%c0_3, %c0_4] : memref<5x128xf32, #tpu.memory_space<vmem>>, vector<1x128xf32>
    %5 = vector.broadcast %4 : vector<1x128xf32> to vector<8x128xf32>
    %6 = arith.addf %3, %5 : vector<8x128xf32>
    %cst_5 = arith.constant 0.000000e+00 : f32
    %7 = vector.broadcast %cst_5 : f32 to vector<8x128xf32>
    %8 = arith.maximumf %6, %7 : vector<8x128xf32>
    %9 = arith.truncf %8 : vector<8x128xf32> to vector<8x128xbf16>
    %c0_6 = arith.constant 0 : index
    %c0_7 = arith.constant 0 : index
    %10 = vector.load %arg3[%c0_6, %c0_7] : memref<128x128xbf16, #tpu.memory_space<vmem>>, vector<128x128xbf16>
    %cst_8 = arith.constant dense<0.000000e+00> : vector<8x128xf32>
    %11 = tpu.matmul %9, %10, %cst_8 {dimension_numbers = #tpu.dot_dimension_numbers<[1], [0], [0], [1], [0, 0, 1, 1], [], []>} : vector<8x128xbf16>, vector<128x128xbf16>, vector<8x128xf32> -> vector<8x128xf32>
    %c1 = arith.constant 1 : index
    %c0_9 = arith.constant 0 : index
    %12 = vector.load %arg7[%c1, %c0_9] : memref<5x128xf32, #tpu.memory_space<vmem>>, vector<1x128xf32>
    %13 = vector.broadcast %12 : vector<1x128xf32> to vector<8x128xf32>
    %14 = arith.addf %11, %13 : vector<8x128xf32>
    %cst_10 = arith.constant 0.000000e+00 : f32
    %15 = vector.broadcast %cst_10 : f32 to vector<8x128xf32>
    %16 = arith.maximumf %14, %15 : vector<8x128xf32>
    %17 = arith.truncf %16 : vector<8x128xf32> to vector<8x128xbf16>
    %c0_11 = arith.constant 0 : index
    %c0_12 = arith.constant 0 : index
    %18 = vector.load %arg4[%c0_11, %c0_12] : memref<128x128xbf16, #tpu.memory_space<vmem>>, vector<128x128xbf16>
    %cst_13 = arith.constant dense<0.000000e+00> : vector<8x128xf32>
    %19 = tpu.matmul %17, %18, %cst_13 {dimension_numbers = #tpu.dot_dimension_numbers<[1], [0], [0], [1], [0, 0, 1, 1], [], []>} : vector<8x128xbf16>, vector<128x128xbf16>, vector<8x128xf32> -> vector<8x128xf32>
    %c2 = arith.constant 2 : index
    %c0_14 = arith.constant 0 : index
    %20 = vector.load %arg7[%c2, %c0_14] : memref<5x128xf32, #tpu.memory_space<vmem>>, vector<1x128xf32>
    %21 = vector.broadcast %20 : vector<1x128xf32> to vector<8x128xf32>
    %22 = arith.addf %19, %21 : vector<8x128xf32>
    %cst_15 = arith.constant 0.000000e+00 : f32
    %23 = vector.broadcast %cst_15 : f32 to vector<8x128xf32>
    %24 = arith.maximumf %22, %23 : vector<8x128xf32>
    %25 = arith.truncf %24 : vector<8x128xf32> to vector<8x128xbf16>
    %c0_16 = arith.constant 0 : index
    %c0_17 = arith.constant 0 : index
    %26 = vector.load %arg5[%c0_16, %c0_17] : memref<128x128xbf16, #tpu.memory_space<vmem>>, vector<128x128xbf16>
    %cst_18 = arith.constant dense<0.000000e+00> : vector<8x128xf32>
    %27 = tpu.matmul %25, %26, %cst_18 {dimension_numbers = #tpu.dot_dimension_numbers<[1], [0], [0], [1], [0, 0, 1, 1], [], []>} : vector<8x128xbf16>, vector<128x128xbf16>, vector<8x128xf32> -> vector<8x128xf32>
    %c3 = arith.constant 3 : index
    %c0_19 = arith.constant 0 : index
    %28 = vector.load %arg7[%c3, %c0_19] : memref<5x128xf32, #tpu.memory_space<vmem>>, vector<1x128xf32>
    %29 = vector.broadcast %28 : vector<1x128xf32> to vector<8x128xf32>
    %30 = arith.addf %27, %29 : vector<8x128xf32>
    %cst_20 = arith.constant 0.000000e+00 : f32
    %31 = vector.broadcast %cst_20 : f32 to vector<8x128xf32>
    %32 = arith.maximumf %30, %31 : vector<8x128xf32>
    %33 = arith.truncf %32 : vector<8x128xf32> to vector<8x128xbf16>
    %c0_21 = arith.constant 0 : index
    %c0_22 = arith.constant 0 : index
    %34 = vector.load %arg6[%c0_21, %c0_22] : memref<8x128xbf16, #tpu.memory_space<vmem>>, vector<8x128xbf16>
    %35 = tpu.transpose %33, [1, 0] : vector<8x128xbf16> -> vector<128x8xbf16>
    %cst_23 = arith.constant dense<0.000000e+00> : vector<8x8xf32>
    %36 = tpu.matmul %34, %35, %cst_23 {dimension_numbers = #tpu.dot_dimension_numbers<[1], [0], [0], [1], [0, 0, 1, 1], [], []>} : vector<8x128xbf16>, vector<128x8xbf16>, vector<8x8xf32> -> vector<8x8xf32>
    %c4 = arith.constant 4 : index
    %c0_24 = arith.constant 0 : index
    %37 = vector.load %arg7[%c4, %c0_24] : memref<5x128xf32, #tpu.memory_space<vmem>>, vector<1x1xf32>
    %38 = vector.broadcast %37 : vector<1x1xf32> to vector<8x8xf32>
    %39 = arith.addf %36, %38 : vector<8x8xf32>
    %40 = vector.extract_strided_slice %39 {offsets = [0, 0], sizes = [1, 8], strides = [1, 1]} : vector<8x8xf32> to vector<1x8xf32>
    %41 = arith.negf %40 : vector<1x8xf32>
    %42 = math.exp %41 : vector<1x8xf32>
    %cst_25 = arith.constant 1.000000e+00 : f32
    %43 = vector.broadcast %cst_25 : f32 to vector<1x8xf32>
    %44 = arith.addf %43, %42 : vector<1x8xf32>
    %45 = arith.divf %43, %44 : vector<1x8xf32>
    %c0_26 = arith.constant 0 : index
    %c0_27 = arith.constant 0 : index
    %46 = vector.load %arg8[%c0_26, %c0_27] : memref<1x8xf32, #tpu.memory_space<vmem>>, vector<1x8xf32>
    tpu.vector_store %arg8[%c0_26, %c0_27], %45 {strides = array<i32>} : memref<1x8xf32, #tpu.memory_space<vmem>>, vector<1x8xf32>,
    return
  }
  func.func @transform_0(%arg0: i32) -> (i32, i32) {
    %c0_i32 = arith.constant 0 : i32
    %c0_i32_0 = arith.constant 0 : i32
    return %arg0, %c0_i32 : i32, i32
  }
  func.func @transform_1(%arg0: i32) -> (i32, i32) {
    %c0_i32 = arith.constant 0 : i32
    %c0_i32_0 = arith.constant 0 : i32
    %c0_i32_1 = arith.constant 0 : i32
    return %c0_i32, %c0_i32_0 : i32, i32
  }
  func.func @transform_2(%arg0: i32) -> (i32, i32) {
    %c0_i32 = arith.constant 0 : i32
    %c0_i32_0 = arith.constant 0 : i32
    %c0_i32_1 = arith.constant 0 : i32
    return %c0_i32, %c0_i32_0 : i32, i32
  }
  func.func @transform_3(%arg0: i32) -> (i32, i32) {
    %c0_i32 = arith.constant 0 : i32
    %c0_i32_0 = arith.constant 0 : i32
    %c0_i32_1 = arith.constant 0 : i32
    return %c0_i32, %c0_i32_0 : i32, i32
  }
  func.func @transform_4(%arg0: i32) -> (i32, i32) {
    %c0_i32 = arith.constant 0 : i32
    %c0_i32_0 = arith.constant 0 : i32
    %c0_i32_1 = arith.constant 0 : i32
    return %c0_i32, %c0_i32_0 : i32, i32
  }
  func.func @transform_5(%arg0: i32) -> (i32, i32) {
    %c0_i32 = arith.constant 0 : i32
    %c0_i32_0 = arith.constant 0 : i32
    %c0_i32_1 = arith.constant 0 : i32
    return %c0_i32, %c0_i32_0 : i32, i32
  }
  func.func @transform_6(%arg0: i32) -> (i32, i32) {
    %c0_i32 = arith.constant 0 : i32
    %c0_i32_0 = arith.constant 0 : i32
    %c0_i32_1 = arith.constant 0 : i32
    return %c0_i32, %c0_i32_0 : i32, i32
  }
  func.func @transform_7(%arg0: i32) -> (i32, i32) {
    %c0_i32 = arith.constant 0 : i32
    %c0_i32_0 = arith.constant 0 : i32
    return %c0_i32, %arg0 : i32, i32
  }
}

</mosaic_0001>

<llo_original>
// kernel: tpu_custom_call.1
$region0: #{tpu_custom_call.1}
  #allocation0 [shape = 'u32[]', space=smem, size = 0x4, offset = 0x4, fixed_abs, tag = 'smem constant byte address 0x4 - core index']
  #allocation1 [shape = 'u32[72,128]{1,0:T(1,128)}', space=vmem, size = 0x9000, scoped, tag = 'internal scratch']
  %s0 = inlined_call_operand.hbm [shape: f32[8,256], index: 0, kind: input, shape index: {}]
  %s1 = inlined_call_operand.hbm [shape: bf16[256,128], index: 1, kind: input, shape index: {}]
  %s2 = inlined_call_operand.hbm [shape: bf16[128,128], index: 2, kind: input, shape index: {}]
  %s3 = inlined_call_operand.hbm [shape: bf16[128,128], index: 3, kind: input, shape index: {}]
  %s4 = inlined_call_operand.hbm [shape: bf16[128,128], index: 4, kind: input, shape index: {}]
  %s5 = inlined_call_operand.vmem [shape: bf16[8,128], index: 5, kind: input, shape index: {}]
  %s6 = inlined_call_operand.hbm [shape: f32[5,128], index: 6, kind: input, shape index: {}]
  %s7 = inlined_call_operand.hbm [shape: f32[1,8], index: 7, kind: output, shape index: {}]
  %s8 = sld [smem:[#allocation0]]
  $region62: #{tpu_custom_call.1} parent=0
    _
  %s10 = ssub.s32 1, %s8
  %s11 = scalar_select 0, %s10, %s8
  $region1: #{tpu_custom_call.1} parent=0
    #allocation2 [shape = 'u8[8192]{0}', space=vmem, size = 0x2000, scoped, tag = 'input window, operand 0, single buffered']
    #allocation3 [shape = 's32[1]{0}', space=sflag, size = 0x4, scoped, tag = 'scoped memory for tpu_custom_call.1']
    #allocation4 [shape = 's32[1]{0}', space=sflag, size = 0x4, scoped, tag = 'scoped memory for tpu_custom_call.1']
    #allocation5 [shape = 'u8[65536]{0}', space=vmem, size = 0x10000, scoped, tag = 'input window, operand 1, single buffered']
    #allocation6 [shape = 's32[1]{0}', space=sflag, size = 0x4, scoped, tag = 'scoped memory for tpu_custom_call.1']
    #allocation7 [shape = 'u8[32768]{0}', space=vmem, size = 0x8000, scoped, tag = 'input window, operand 2, single buffered']
    #allocation8 [shape = 'u8[32768]{0}', space=vmem, size = 0x8000, scoped, tag = 'input window, operand 3, single buffered']
    #allocation9 [shape = 's32[1]{0}', space=sflag, size = 0x4, scoped, tag = 'scoped memory for tpu_custom_call.1']
    #allocation10 [shape = 'u8[32768]{0}', space=vmem, size = 0x8000, scoped, tag = 'input window, operand 4, single buffered']
    #allocation11 [shape = 'u8[4096]{0}', space=vmem, size = 0x1000, scoped, tag = 'input window, operand 6, single buffered']
    #allocation12 [shape = 's32[1]{0}', space=sflag, size = 0x4, scoped, tag = 'scoped memory for tpu_custom_call.1']
    #allocation13 [shape = 'u8[512]{0}', space=vmem, size = 0x400, scoped, tag = 'output window, operand 0, single buffered']
    %12 = vsyncpa [#allocation3], 0
    %13 = vsyncpa [#allocation6], 0
    %14 = vsyncpa [#allocation9], 0
    %15 = vsyncpa [#allocation12], 0
    %16 = vsyncpa [#allocation4], 0
    // Predicated region
    $region2: #{tpu_custom_call.1} parent=1 // pred_check
      _
    $region3: #{tpu_custom_call.1} parent=1 // pred_check_branch
      %18 = sbr.rel (0) target = $region5
    $region4: #{tpu_custom_call.1} parent=1 // pred_region
      %20 = vsyncadd [#allocation3], 0
      %s22 = sshll.u32 %s0, 4
      %s23 = int_to_ptr.hbm [resolvable:$true] %s22
      %s24 = sshll.u32 [#allocation2], 4
      %s25 = int_to_ptr.vmem [resolvable:$true] %s24
      %27 = dma.hbm_to_vmem [thread:$0]  %s23, 256, %s25, [#allocation3]
    $region5: #{tpu_custom_call.1} parent=1 // pred_fallthru
      _
    // Predicated region
    $region6: #{tpu_custom_call.1} parent=1 // pred_check
      _
    $region7: #{tpu_custom_call.1} parent=1 // pred_check_branch
      %29 = sbr.rel (0) target = $region9
    $region8: #{tpu_custom_call.1} parent=1 // pred_region
      %31 = vsyncadd [#allocation6], 0
      %s32 = sshll.u32 %s1, 4
      %s33 = int_to_ptr.hbm [resolvable:$true] %s32
      %s34 = sshll.u32 [#allocation5], 4
      %s35 = int_to_ptr.vmem [resolvable:$true] %s34
      %40 = dma.hbm_to_vmem [thread:$0]  %s33, 2048, %s35, [#allocation6], 64, 64, 4
    $region9: #{tpu_custom_call.1} parent=1 // pred_fallthru
      _
    // Predicated region
    $region10: #{tpu_custom_call.1} parent=1 // pred_check
      _
    $region11: #{tpu_custom_call.1} parent=1 // pred_check_branch
      %42 = sbr.rel (0) target = $region13
    $region12: #{tpu_custom_call.1} parent=1 // pred_region
      %44 = vsyncadd [#allocation6], 0
      %s45 = sshll.u32 %s2, 4
      %s46 = int_to_ptr.hbm [resolvable:$true] %s45
      %s47 = sshll.u32 [#allocation7], 4
      %s48 = int_to_ptr.vmem [resolvable:$true] %s47
      %53 = dma.hbm_to_vmem [thread:$0]  %s46, 1024, %s48, [#allocation6], 64, 64, 4
    $region13: #{tpu_custom_call.1} parent=1 // pred_fallthru
      _
    // Predicated region
    $region14: #{tpu_custom_call.1} parent=1 // pred_check
      _
    $region15: #{tpu_custom_call.1} parent=1 // pred_check_branch
      %55 = sbr.rel (0) target = $region17
    $region16: #{tpu_custom_call.1} parent=1 // pred_region
      %57 = vsyncadd [#allocation9], 0
      %s58 = sshll.u32 %s3, 4
      %s59 = int_to_ptr.hbm [resolvable:$true] %s58
      %s60 = sshll.u32 [#allocation8], 4
      %s61 = int_to_ptr.vmem [resolvable:$true] %s60
      %66 = dma.hbm_to_vmem [thread:$0]  %s59, 1024, %s61, [#allocation9], 64, 64, 4
    $region17: #{tpu_custom_call.1} parent=1 // pred_fallthru
      _
    // Predicated region
    $region18: #{tpu_custom_call.1} parent=1 // pred_check
      _
    $region19: #{tpu_custom_call.1} parent=1 // pred_check_branch
      %68 = sbr.rel (0) target = $region21
    $region20: #{tpu_custom_call.1} parent=1 // pred_region
      %70 = vsyncadd [#allocation9], 0
      %s71 = sshll.u32 %s4, 4
      %s72 = int_to_ptr.hbm [resolvable:$true] %s71
      %s73 = sshll.u32 [#allocation10], 4
      %s74 = int_to_ptr.vmem [resolvable:$true] %s73
      %79 = dma.hbm_to_vmem [thread:$0]  %s72, 1024, %s74, [#allocation9], 64, 64, 4
    $region21: #{tpu_custom_call.1} parent=1 // pred_fallthru
      _
    // Predicated region
    $region22: #{tpu_custom_call.1} parent=1 // pred_check
      _
    $region23: #{tpu_custom_call.1} parent=1 // pred_check_branch
      %81 = sbr.rel (0) target = $region25
    $region24: #{tpu_custom_call.1} parent=1 // pred_region
      _
    $region25: #{tpu_custom_call.1} parent=1 // pred_fallthru
      _
    // Predicated region
    $region26: #{tpu_custom_call.1} parent=1 // pred_check
      _
    $region27: #{tpu_custom_call.1} parent=1 // pred_check_branch
      %83 = sbr.rel (0) target = $region29
    $region28: #{tpu_custom_call.1} parent=1 // pred_region
      %85 = vsyncadd [#allocation12], 0
      %s87 = sshll.u32 %s6, 4
      %s88 = int_to_ptr.hbm [resolvable:$true] %s87
      %s89 = sshll.u32 [#allocation11], 4
      %s90 = int_to_ptr.vmem [resolvable:$true] %s89
      %92 = dma.hbm_to_vmem [thread:$0]  %s88, 128, %s90, [#allocation12]
    $region29: #{tpu_custom_call.1} parent=1 // pred_fallthru
      _
    // Predicated region
    $region30: #{tpu_custom_call.1} parent=1 // pred_check
      _
    $region31: #{tpu_custom_call.1} parent=1 // pred_check_branch
      %94 = sbr.rel (0) target = $region33
    $region32: #{tpu_custom_call.1} parent=1 // pred_region
      %96 = dma.done [#allocation3], 256
    $region33: #{tpu_custom_call.1} parent=1 // pred_fallthru
      _
    // Predicated region
    $region34: #{tpu_custom_call.1} parent=1 // pred_check
      _
    $region35: #{tpu_custom_call.1} parent=1 // pred_check_branch
      %98 = sbr.rel (0) target = $region37
    $region36: #{tpu_custom_call.1} parent=1 // pred_region
      %100 = dma.done [#allocation6], 2048
    $region37: #{tpu_custom_call.1} parent=1 // pred_fallthru
      _
    // Predicated region
    $region38: #{tpu_custom_call.1} parent=1 // pred_check
      _
    $region39: #{tpu_custom_call.1} parent=1 // pred_check_branch
      %102 = sbr.rel (0) target = $region41
    $region40: #{tpu_custom_call.1} parent=1 // pred_region
      %104 = dma.done [#allocation6], 1024
    $region41: #{tpu_custom_call.1} parent=1 // pred_fallthru
      _
    // Predicated region
    $region42: #{tpu_custom_call.1} parent=1 // pred_check
      _
    $region43: #{tpu_custom_call.1} parent=1 // pred_check_branch
      %106 = sbr.rel (0) target = $region45
    $region44: #{tpu_custom_call.1} parent=1 // pred_region
      %108 = dma.done [#allocation9], 1024
    $region45: #{tpu_custom_call.1} parent=1 // pred_fallthru
      _
    // Predicated region
    $region46: #{tpu_custom_call.1} parent=1 // pred_check
      _
    $region47: #{tpu_custom_call.1} parent=1 // pred_check_branch
      %110 = sbr.rel (0) target = $region49
    $region48: #{tpu_custom_call.1} parent=1 // pred_region
      %112 = dma.done [#allocation9], 1024
    $region49: #{tpu_custom_call.1} parent=1 // pred_fallthru
      _
    // Predicated region
    $region50: #{tpu_custom_call.1} parent=1 // pred_check
      _
    $region51: #{tpu_custom_call.1} parent=1 // pred_check_branch
      %114 = sbr.rel (0) target = $region53
    $region52: #{tpu_custom_call.1} parent=1 // pred_region
      %116 = dma.done [#allocation12], 128
    $region53: #{tpu_custom_call.1} parent=1 // pred_fallthru
      _
    %v118 = vld [vmem:[#allocation2] sm:$0xff]
    %v119 = vld [vmem:[#allocation2 + $0x8] sm:$0xff]
    %v120 = vpack.c.bf16 %v118, %v118
    %v121 = vpack.c.bf16 %v119, %v119
    %v122 = vld [vmem:[#allocation5] sm:$0xf]
    %v123 = vld [vmem:[#allocation5 + $0x4] sm:$0xf]
    %v124 = vld [vmem:[#allocation5 + $0x8] sm:$0xf]
    %v125 = vld [vmem:[#allocation5 + $0xc] sm:$0xf]
    %v126 = vld [vmem:[#allocation5 + $0x10] sm:$0xf]
    %v127 = vld [vmem:[#allocation5 + $0x14] sm:$0xf]
    %v128 = vld [vmem:[#allocation5 + $0x18] sm:$0xf]
    %v129 = vld [vmem:[#allocation5 + $0x1c] sm:$0xf]
    %v130 = vld [vmem:[#allocation5 + $0x20] sm:$0xf]
    %v131 = vld [vmem:[#allocation5 + $0x24] sm:$0xf]
    %v132 = vld [vmem:[#allocation5 + $0x28] sm:$0xf]
    %v133 = vld [vmem:[#allocation5 + $0x2c] sm:$0xf]
    %v134 = vld [vmem:[#allocation5 + $0x30] sm:$0xf]
    %v135 = vld [vmem:[#allocation5 + $0x34] sm:$0xf]
    %v136 = vld [vmem:[#allocation5 + $0x38] sm:$0xf]
    %v137 = vld [vmem:[#allocation5 + $0x3c] sm:$0xf]
    %v138 = vld [vmem:[#allocation5 + $0x40] sm:$0xf]
    %v139 = vld [vmem:[#allocation5 + $0x44] sm:$0xf]
    %v140 = vld [vmem:[#allocation5 + $0x48] sm:$0xf]
    %v141 = vld [vmem:[#allocation5 + $0x4c] sm:$0xf]
    %v142 = vld [vmem:[#allocation5 + $0x50] sm:$0xf]
    %v143 = vld [vmem:[#allocation5 + $0x54] sm:$0xf]
    %v144 = vld [vmem:[#allocation5 + $0x58] sm:$0xf]
    %v145 = vld [vmem:[#allocation5 + $0x5c] sm:$0xf]
    %v146 = vld [vmem:[#allocation5 + $0x60] sm:$0xf]
    %v147 = vld [vmem:[#allocation5 + $0x64] sm:$0xf]
    %v148 = vld [vmem:[#allocation5 + $0x68] sm:$0xf]
    %v149 = vld [vmem:[#allocation5 + $0x6c] sm:$0xf]
    %v150 = vld [vmem:[#allocation5 + $0x70] sm:$0xf]
    %v151 = vld [vmem:[#allocation5 + $0x74] sm:$0xf]
    %v152 = vld [vmem:[#allocation5 + $0x78] sm:$0xf]
    %v153 = vld [vmem:[#allocation5 + $0x7c] sm:$0xf]
    %v154 = vld [vmem:[#allocation11] sm:$0x1]
    %v155 = vperm.slane %v154, 0
    %v188 = vunpack.c.l.b16 %v122
    %v189 = vunpack.c.l.b16 %v123
    %v190 = vunpack.c.l.b16 %v124
    %v191 = vunpack.c.l.b16 %v125
    %v192 = vunpack.c.l.b16 %v126
    %v193 = vunpack.c.l.b16 %v127
    %v194 = vunpack.c.l.b16 %v128
    %v195 = vunpack.c.l.b16 %v129
    %v196 = vunpack.c.l.b16 %v130
    %v197 = vunpack.c.l.b16 %v131
    %v198 = vunpack.c.l.b16 %v132
    %v199 = vunpack.c.l.b16 %v133
    %v200 = vunpack.c.l.b16 %v134
    %v201 = vunpack.c.l.b16 %v135
    %v202 = vunpack.c.l.b16 %v136
    %v203 = vunpack.c.l.b16 %v137
    %v204 = vunpack.c.l.b16 %v138
    %v205 = vunpack.c.l.b16 %v139
    %v206 = vunpack.c.l.b16 %v140
    %v207 = vunpack.c.l.b16 %v141
    %v208 = vunpack.c.l.b16 %v142
    %v209 = vunpack.c.l.b16 %v143
    %v210 = vunpack.c.l.b16 %v144
    %v211 = vunpack.c.l.b16 %v145
    %v212 = vunpack.c.l.b16 %v146
    %v213 = vunpack.c.l.b16 %v147
    %v214 = vunpack.c.l.b16 %v148
    %v215 = vunpack.c.l.b16 %v149
    %v216 = vunpack.c.l.b16 %v150
    %v217 = vunpack.c.l.b16 %v151
    %v218 = vunpack.c.l.b16 %v152
    %v219 = vunpack.c.l.b16 %v153
    %v220 = vpack.c.b16 %v189, %v188
    %v221 = vpack.c.b16 %v191, %v190
    %v222 = vpack.c.b16 %v193, %v192
    %v223 = vpack.c.b16 %v195, %v194
    %v224 = vpack.c.b16 %v197, %v196
    %v225 = vpack.c.b16 %v199, %v198
    %v226 = vpack.c.b16 %v201, %v200
    %v227 = vpack.c.b16 %v203, %v202
    %v228 = vpack.c.b16 %v205, %v204
    %v229 = vpack.c.b16 %v207, %v206
    %v230 = vpack.c.b16 %v209, %v208
    %v231 = vpack.c.b16 %v211, %v210
    %v232 = vpack.c.b16 %v213, %v212
    %v233 = vpack.c.b16 %v215, %v214
    %v234 = vpack.c.b16 %v217, %v216
    %v235 = vpack.c.b16 %v219, %v218
    %252 = vmatpush.bf16.msra.mxu0 %v227
    %253 = vmatpush.bf16.msra.mxu0 %v226
    %254 = vmatpush.bf16.msra.mxu0 %v225
    %255 = vmatpush.bf16.msra.mxu0 %v224
    %256 = vmatpush.bf16.msra.mxu0 %v223
    %257 = vmatpush.bf16.msra.mxu0 %v222
    %258 = vmatpush.bf16.msra.mxu0 %v221
    %259 = vmatpush.bf16.msra.mxu0 %v220
    %260 = vmatmul.bf16.gmra.mxu0 %v120
    %v261 = vpop.f32.mrf.mxu0
    %v262 = vadd.f32 %v155, %v261
    %v263 = vpop.f32.mrf.mxu0
    %264 = vdwg.mxu0
    %265 = vmatpush.bf16.msra.mxu0 %v235
    %266 = vmatpush.bf16.msra.mxu0 %v234
    %267 = vmatpush.bf16.msra.mxu0 %v233
    %268 = vmatpush.bf16.msra.mxu0 %v232
    %269 = vmatpush.bf16.msra.mxu0 %v231
    %270 = vmatpush.bf16.msra.mxu0 %v230
    %271 = vmatpush.bf16.msra.mxu0 %v229
    %272 = vmatpush.bf16.msra.mxu0 %v228
    %273 = vmatmul.bf16.gmra.mxu0 %v121
    %v274 = vpop.f32.mrf.mxu0
    %v275 = vadd.f32 %v262, %v274
    %v276 = vpop.f32.mrf.mxu0
    %277 = vdwg.mxu0
    %v278 = vmax.f32 %v275, 0.0
    %v279 = vpack.c.bf16 %v278, %v278
    %v280 = vld [vmem:[#allocation7] sm:$0xf]
    %v281 = vld [vmem:[#allocation7 + $0x4] sm:$0xf]
    %v282 = vld [vmem:[#allocation7 + $0x8] sm:$0xf]
    %v283 = vld [vmem:[#allocation7 + $0xc] sm:$0xf]
    %v284 = vld [vmem:[#allocation7 + $0x10] sm:$0xf]
    %v285 = vld [vmem:[#allocation7 + $0x14] sm:$0xf]
    %v286 = vld [vmem:[#allocation7 + $0x18] sm:$0xf]
    %v287 = vld [vmem:[#allocation7 + $0x1c] sm:$0xf]
    %v288 = vld [vmem:[#allocation7 + $0x20] sm:$0xf]
    %v289 = vld [vmem:[#allocation7 + $0x24] sm:$0xf]
    %v290 = vld [vmem:[#allocation7 + $0x28] sm:$0xf]
    %v291 = vld [vmem:[#allocation7 + $0x2c] sm:$0xf]
    %v292 = vld [vmem:[#allocation7 + $0x30] sm:$0xf]
    %v293 = vld [vmem:[#allocation7 + $0x34] sm:$0xf]
    %v294 = vld [vmem:[#allocation7 + $0x38] sm:$0xf]
    %v295 = vld [vmem:[#allocation7 + $0x3c] sm:$0xf]
    %v296 = vld [vmem:[#allocation11 + $0x1] sm:$0x1]
    %v297 = vperm.slane %v296, 0
    %v314 = vunpack.c.l.b16 %v280
    %v315 = vunpack.c.l.b16 %v281
    %v316 = vunpack.c.l.b16 %v282
    %v317 = vunpack.c.l.b16 %v283
    %v318 = vunpack.c.l.b16 %v284
    %v319 = vunpack.c.l.b16 %v285
    %v320 = vunpack.c.l.b16 %v286
    %v321 = vunpack.c.l.b16 %v287
    %v322 = vunpack.c.l.b16 %v288
    %v323 = vunpack.c.l.b16 %v289
    %v324 = vunpack.c.l.b16 %v290
    %v325 = vunpack.c.l.b16 %v291
    %v326 = vunpack.c.l.b16 %v292
    %v327 = vunpack.c.l.b16 %v293
    %v328 = vunpack.c.l.b16 %v294
    %v329 = vunpack.c.l.b16 %v295
    %v330 = vpack.c.b16 %v315, %v314
    %v331 = vpack.c.b16 %v317, %v316
    %v332 = vpack.c.b16 %v319, %v318
    %v333 = vpack.c.b16 %v321, %v320
    %v334 = vpack.c.b16 %v323, %v322
    %v335 = vpack.c.b16 %v325, %v324
    %v336 = vpack.c.b16 %v327, %v326
    %v337 = vpack.c.b16 %v329, %v328
    %346 = vmatpush.bf16.msra.mxu0 %v337
    %347 = vmatpush.bf16.msra.mxu0 %v336
    %348 = vmatpush.bf16.msra.mxu0 %v335
    %349 = vmatpush.bf16.msra.mxu0 %v334
    %350 = vmatpush.bf16.msra.mxu0 %v333
    %351 = vmatpush.bf16.msra.mxu0 %v332
    %352 = vmatpush.bf16.msra.mxu0 %v331
    %353 = vmatpush.bf16.msra.mxu0 %v330
    %354 = vmatmul.bf16.gmra.mxu0 %v279
    %v355 = vpop.f32.mrf.mxu0
    %v356 = vadd.f32 %v297, %v355
    %v357 = vpop.f32.mrf.mxu0
    %358 = vdwg.mxu0
    %v359 = vmax.f32 %v356, 0.0
    %v360 = vpack.c.bf16 %v359, %v359
    %v361 = vld [vmem:[#allocation8] sm:$0xf]
    %v362 = vld [vmem:[#allocation8 + $0x4] sm:$0xf]
    %v363 = vld [vmem:[#allocation8 + $0x8] sm:$0xf]
    %v364 = vld [vmem:[#allocation8 + $0xc] sm:$0xf]
    %v365 = vld [vmem:[#allocation8 + $0x10] sm:$0xf]
    %v366 = vld [vmem:[#allocation8 + $0x14] sm:$0xf]
    %v367 = vld [vmem:[#allocation8 + $0x18] sm:$0xf]
    %v368 = vld [vmem:[#allocation8 + $0x1c] sm:$0xf]
    %v369 = vld [vmem:[#allocation8 + $0x20] sm:$0xf]
    %v370 = vld [vmem:[#allocation8 + $0x24] sm:$0xf]
    %v371 = vld [vmem:[#allocation8 + $0x28] sm:$0xf]
    %v372 = vld [vmem:[#allocation8 + $0x2c] sm:$0xf]
    %v373 = vld [vmem:[#allocation8 + $0x30] sm:$0xf]
    %v374 = vld [vmem:[#allocation8 + $0x34] sm:$0xf]
    %v375 = vld [vmem:[#allocation8 + $0x38] sm:$0xf]
    %v376 = vld [vmem:[#allocation8 + $0x3c] sm:$0xf]
    %v377 = vld [vmem:[#allocation11 + $0x2] sm:$0x1]
    %v378 = vperm.slane %v377, 0
    %v395 = vunpack.c.l.b16 %v361
    %v396 = vunpack.c.l.b16 %v362
    %v397 = vunpack.c.l.b16 %v363
    %v398 = vunpack.c.l.b16 %v364
    %v399 = vunpack.c.l.b16 %v365
    %v400 = vunpack.c.l.b16 %v366
    %v401 = vunpack.c.l.b16 %v367
    %v402 = vunpack.c.l.b16 %v368
    %v403 = vunpack.c.l.b16 %v369
    %v404 = vunpack.c.l.b16 %v370
    %v405 = vunpack.c.l.b16 %v371
    %v406 = vunpack.c.l.b16 %v372
    %v407 = vunpack.c.l.b16 %v373
    %v408 = vunpack.c.l.b16 %v374
    %v409 = vunpack.c.l.b16 %v375
    %v410 = vunpack.c.l.b16 %v376
    %v411 = vpack.c.b16 %v396, %v395
    %v412 = vpack.c.b16 %v398, %v397
    %v413 = vpack.c.b16 %v400, %v399
    %v414 = vpack.c.b16 %v402, %v401
    %v415 = vpack.c.b16 %v404, %v403
    %v416 = vpack.c.b16 %v406, %v405
    %v417 = vpack.c.b16 %v408, %v407
    %v418 = vpack.c.b16 %v410, %v409
    %427 = vmatpush.bf16.msra.mxu0 %v418
    %428 = vmatpush.bf16.msra.mxu0 %v417
    %429 = vmatpush.bf16.msra.mxu0 %v416
    %430 = vmatpush.bf16.msra.mxu0 %v415
    %431 = vmatpush.bf16.msra.mxu0 %v414
    %432 = vmatpush.bf16.msra.mxu0 %v413
    %433 = vmatpush.bf16.msra.mxu0 %v412
    %434 = vmatpush.bf16.msra.mxu0 %v411
    %435 = vmatmul.bf16.gmra.mxu0 %v360
    %v436 = vpop.f32.mrf.mxu0
    %v437 = vadd.f32 %v378, %v436
    %v438 = vpop.f32.mrf.mxu0
    %439 = vdwg.mxu0
    %v440 = vmax.f32 %v437, 0.0
    %v441 = vpack.c.bf16 %v440, %v440
    %v442 = vld [vmem:[#allocation10] sm:$0xf]
    %v443 = vld [vmem:[#allocation10 + $0x4] sm:$0xf]
    %v444 = vld [vmem:[#allocation10 + $0x8] sm:$0xf]
    %v445 = vld [vmem:[#allocation10 + $0xc] sm:$0xf]
    %v446 = vld [vmem:[#allocation10 + $0x10] sm:$0xf]
    %v447 = vld [vmem:[#allocation10 + $0x14] sm:$0xf]
    %v448 = vld [vmem:[#allocation10 + $0x18] sm:$0xf]
    %v449 = vld [vmem:[#allocation10 + $0x1c] sm:$0xf]
    %v450 = vld [vmem:[#allocation10 + $0x20] sm:$0xf]
    %v451 = vld [vmem:[#allocation10 + $0x24] sm:$0xf]
    %v452 = vld [vmem:[#allocation10 + $0x28] sm:$0xf]
    %v453 = vld [vmem:[#allocation10 + $0x2c] sm:$0xf]
    %v454 = vld [vmem:[#allocation10 + $0x30] sm:$0xf]
    %v455 = vld [vmem:[#allocation10 + $0x34] sm:$0xf]
    %v456 = vld [vmem:[#allocation10 + $0x38] sm:$0xf]
    %v457 = vld [vmem:[#allocation10 + $0x3c] sm:$0xf]
    %v458 = vld [vmem:[#allocation11 + $0x3] sm:$0x1]
    %v459 = vperm.slane %v458, 0
    %v476 = vunpack.c.l.b16 %v442
    %v477 = vunpack.c.l.b16 %v443
    %v478 = vunpack.c.l.b16 %v444
    %v479 = vunpack.c.l.b16 %v445
    %v480 = vunpack.c.l.b16 %v446
    %v481 = vunpack.c.l.b16 %v447
    %v482 = vunpack.c.l.b16 %v448
    %v483 = vunpack.c.l.b16 %v449
    %v484 = vunpack.c.l.b16 %v450
    %v485 = vunpack.c.l.b16 %v451
    %v486 = vunpack.c.l.b16 %v452
    %v487 = vunpack.c.l.b16 %v453
    %v488 = vunpack.c.l.b16 %v454
    %v489 = vunpack.c.l.b16 %v455
    %v490 = vunpack.c.l.b16 %v456
    %v491 = vunpack.c.l.b16 %v457
    %v492 = vpack.c.b16 %v477, %v476
    %v493 = vpack.c.b16 %v479, %v478
    %v494 = vpack.c.b16 %v481, %v480
    %v495 = vpack.c.b16 %v483, %v482
    %v496 = vpack.c.b16 %v485, %v484
    %v497 = vpack.c.b16 %v487, %v486
    %v498 = vpack.c.b16 %v489, %v488
    %v499 = vpack.c.b16 %v491, %v490
    %508 = vmatpush.bf16.msra.mxu0 %v499
    %509 = vmatpush.bf16.msra.mxu0 %v498
    %510 = vmatpush.bf16.msra.mxu0 %v497
    %511 = vmatpush.bf16.msra.mxu0 %v496
    %512 = vmatpush.bf16.msra.mxu0 %v495
    %513 = vmatpush.bf16.msra.mxu0 %v494
    %514 = vmatpush.bf16.msra.mxu0 %v493
    %515 = vmatpush.bf16.msra.mxu0 %v492
    %516 = vmatmul.bf16.gmra.mxu0 %v441
    %v517 = vpop.f32.mrf.mxu0
    %v518 = vadd.f32 %v459, %v517
    %v519 = vpop.f32.mrf.mxu0
    %520 = vdwg.mxu0
    %v521 = vmax.f32 %v518, 0.0
    %v522 = vpack.c.bf16 %v521, %v521
    %v523 = vld [vmem:[%s5] sm:$0xf]
    %v524 = vld [vmem:[#allocation11 + $0x4] sm:$0x1]
    %s526 = vtos %v524
    %v527 = vstv %s526
    %529 = vmatpush.bf16.xpose.msra.mxu0 0
    %530 = vmatpush.bf16.xpose.msra.mxu0 0
    %531 = vmatpush.bf16.xpose.msra.mxu0 0
    %532 = vmatpush.bf16.xpose.msra.mxu0 0
    %533 = vmatpush.bf16.xpose.msra.mxu0 0
    %534 = vmatpush.bf16.xpose.msra.mxu0 0
    %535 = vmatpush.bf16.xpose.msra.mxu0 0
    %536 = vmatpush.bf16.xpose.msra.mxu0 %v522
    %537 = vmatmul.bf16.gmra.mxu0 %v523
    %v538 = vpop.f32.mrf.mxu0
    %v539 = vadd.f32 %v527, %v538
    %v540 = vpop.f32.mrf.mxu0
    %541 = vdwg.mxu0
    %v542 = vxor.u32 %v539, 2147483648
    %v543 = vmul.f32 %v542, 1.442695
    %v544 = vpow.pop %v543
    %v545 = vadd.f32 %v544, 1.0
    %v546 = vrcp.pop %v545
    %v547 = vmul.f32 %v545, %v546
    %v548 = vsub.f32 1.0, %v547
    %v549 = vmul.f32 %v546, %v548
    %v550 = vadd.f32 %v546, %v549
    %vm551 = vweird.f32 %v545
    %vm552 = vweird.f32 %v546
    %vm553 = vmor %vm551, %vm552
    %v554 = vsel %vm553, %v546, %v550
    %v555 = vand.u32 2147483647, %v545
    %vm556 = vcmp.eq.f32.partialorder %v555, 8.507059e+37
    %v557 = vand.u32 %v545, 2147483648
    %v558 = vor.u32 1.1754944e-38, %v557
    %v559 = vsel %vm556, %v558, %v554
    %v560 = vmul.f32 1.0, %v559
    %vm561 = vcmask 57344
    %562 = vst.msk [vmem:[#allocation13] sm:$0x1] %vm561, %v560
    // Predicated region
    $region54: #{tpu_custom_call.1} parent=1 // pred_check
      _
    $region55: #{tpu_custom_call.1} parent=1 // pred_check_branch
      %564 = sbr.rel (0) target = $region57
    $region56: #{tpu_custom_call.1} parent=1 // pred_region
      %566 = vsyncadd [#allocation4], 0
      %s568 = sshll.u32 [#allocation13], 4
      %s569 = int_to_ptr.vmem [resolvable:$true] %s568
      %s570 = sshll.u32 %s7, 4
      %s571 = int_to_ptr.hbm [resolvable:$true] %s570
      %573 = dma.vmem_to_hbm [thread:$0]  %s569, 16, %s571, [#allocation4]
    $region57: #{tpu_custom_call.1} parent=1 // pred_fallthru
      _
    // Predicated region
    $region58: #{tpu_custom_call.1} parent=1 // pred_check
      _
    $region59: #{tpu_custom_call.1} parent=1 // pred_check_branch
      %575 = sbr.rel (0) target = $region61
    $region60: #{tpu_custom_call.1} parent=1 // pred_region
      %577 = dma.done [#allocation4], 16
    $region61: #{tpu_custom_call.1} parent=1 // pred_fallthru
      _
    %578 = vsyncpa [#allocation3], 1
    %579 = vsyncpa [#allocation6], 1
    %580 = vsyncpa [#allocation9], 1
    %581 = vsyncpa [#allocation12], 1
    %582 = vsyncpa [#allocation4], 1

</llo_original>
